<compile_context>
chip_gen: v7x
topology: tpu7x:2x2x1
jax: 0.10.0
libtpu: 0.0.40
codegen_flags: <defaults>
</compile_context>

<pallas_src>
import functools

import jax
import jax.numpy as jnp
from jax.experimental import pallas as pl
from jax.experimental.pallas import tpu as pltpu

BN_EPS = 1e-5  # nn.BatchNorm2d default


def _round_up(x, m):
    return ((x + m - 1) // m) * m


def conv_stats_kernel(m_total, p_ref, w_ref, g_ref, b_ref,
                      y_ref, ss_ref, sum_ref, sumsq_ref):
    """Pass 1: conv matmul per M-tile + running per-channel sum / sumsq.

    p_ref: (TM, Kp) im2col tile, w_ref: (Kp, Cp), g_ref/b_ref: (1, Cp)
    y_ref: (TM, Cp) conv output tile, ss_ref: (2, Cp) [scale; shift]
    sum_ref/sumsq_ref: (1, Cp) VMEM scratch accumulators.
    """
    i = pl.program_id(0)

    @pl.when(i == 0)
    def _():
        sum_ref[...] = jnp.zeros_like(sum_ref)
        sumsq_ref[...] = jnp.zeros_like(sumsq_ref)

    # Conv as matmul on the MXU (f32 accumulation).
    y = jnp.dot(p_ref[...], w_ref[...], preferred_element_type=jnp.float32)
    y_ref[...] = y

    # One-pass statistics: sum and sum of squares (no centered temporary).
    sum_ref[...] += jnp.sum(y, axis=0, keepdims=True)
    sumsq_ref[...] += jnp.sum(y * y, axis=0, keepdims=True)

    @pl.when(i == pl.num_programs(0) - 1)
    def _():
        inv_m = jnp.float32(1.0 / m_total)
        mean = sum_ref[...] * inv_m
        var = sumsq_ref[...] * inv_m - mean * mean        # biased (training mode)
        scale = g_ref[...] * jax.lax.rsqrt(var + BN_EPS)  # EUP rsqrt
        shift = b_ref[...] - mean * scale
        ss_ref[...] = jnp.concatenate([scale, shift], axis=0)


def bn_relu_kernel(y_ref, ss_ref, o_ref):
    """Pass 2: elementwise BN affine + ReLU on lane-dense tiles."""
    scale = ss_ref[0:1, :]
    shift = ss_ref[1:2, :]
    o_ref[...] = jnp.maximum(y_ref[...] * scale + shift, jnp.float32(0.0))


def conv_bn_forward(x_nchw, w_oihw, gamma, beta, stride, *, tm=512):
    """Forward pass of conv_bn. x_nchw: (N, Cin, H, W) f32. Returns NCHW f32."""
    N, Cin, H, W = x_nchw.shape
    Cout = w_oihw.shape[0]
    k, pad = 3, 1

    # ---- glue: NCHW -> NHWC, spatial pad, im2col -------------------------
    x = jnp.transpose(x_nchw, (0, 2, 3, 1)).astype(jnp.float32)
    xp = jnp.pad(x, ((0, 0), (pad, pad), (pad, pad), (0, 0)))
    Ho = (H + 2 * pad - k) // stride + 1
    Wo = (W + 2 * pad - k) // stride + 1

    cols = []
    for kh in range(k):
        for kw in range(k):
            cols.append(
                xp[:,
                   kh:kh + (Ho - 1) * stride + 1:stride,
                   kw:kw + (Wo - 1) * stride + 1:stride,
                   :])
    patches = jnp.stack(cols, axis=3)  # (N, Ho, Wo, 9, Cin), tap-major, then Cin

    M = N * Ho * Wo
    K = k * k * Cin
    Kp = _round_up(K, 128)       # lane-dense contraction dim
    Cp = _round_up(Cout, 128)    # lane-dense output channels

    # ---- tile selection: keep double buffers within a v7x-safe budget ----
    TM = min(tm, _round_up(M, 8))
    VMEM_BUDGET = 40 * 1024 * 1024
    while TM > 8 and 4 * (2 * TM * Kp + 2 * Kp * Cp + 2 * TM * Cp + 16 * Cp) > VMEM_BUDGET:
        TM //= 2
    TM = max(8, TM - (TM % 8))
    Mp = _round_up(M, TM)
    grid_m = Mp // TM

    # ---- zero-pad operands to lane/tile-dense shapes ---------------------
    p = patches.reshape(M, K)
    p = jnp.pad(p, ((0, Mp - M), (0, Kp - K)))

    # PyTorch conv weight (Cout, Cin, Kh, Kw) -> (Kh, Kw, Cin, Cout) -> (K, Cout)
    w_mat = jnp.transpose(w_oihw, (2, 3, 1, 0)).reshape(K, Cout).astype(jnp.float32)
    w_mat = jnp.pad(w_mat, ((0, Kp - K), (0, Cp - Cout)))
    g = jnp.pad(gamma.reshape(1, Cout).astype(jnp.float32), ((0, 0), (0, Cp - Cout)))
    b = jnp.pad(beta.reshape(1, Cout).astype(jnp.float32), ((0, 0), (0, Cp - Cout)))

    vmem_limit = 48 * 1024 * 1024

    # ---- pass 1: matmul + BN statistics (M axis carries the accumulator) --
    y_mat, scale_shift = pl.pallas_call(
        functools.partial(conv_stats_kernel, float(M)),
        out_shape=(
            jax.ShapeDtypeStruct((Mp, Cp), jnp.float32),
            jax.ShapeDtypeStruct((2, Cp), jnp.float32),
        ),
        grid=(grid_m,),
        in_specs=[
            pl.BlockSpec((TM, Kp), lambda i: (i, 0)),
            pl.BlockSpec((Kp, Cp), lambda i: (0, 0)),
            pl.BlockSpec((1, Cp), lambda i: (0, 0)),
            pl.BlockSpec((1, Cp), lambda i: (0, 0)),
        ],
        out_specs=(
            pl.BlockSpec((TM, Cp), lambda i: (i, 0)),
            pl.BlockSpec((2, Cp), lambda i: (0, 0)),
        ),
        scratch_shapes=[
            pltpu.VMEM((1, Cp), jnp.float32),
            pltpu.VMEM((1, Cp), jnp.float32),
        ],
        compiler_params=pltpu.CompilerParams(
            dimension_semantics=("arbitrary",),
            vmem_limit_bytes=vmem_limit,
        ),
    )(p, w_mat, g, b)

    # ---- pass 2: BN affine + ReLU, parallel over M tiles ------------------
    out_mat = pl.pallas_call(
        bn_relu_kernel,
        out_shape=jax.ShapeDtypeStruct((Mp, Cp), jnp.float32),
        grid=(grid_m,),
        in_specs=[
            pl.BlockSpec((TM, Cp), lambda i: (i, 0)),
            pl.BlockSpec((2, Cp), lambda i: (0, 0)),
        ],
        out_specs=pl.BlockSpec((TM, Cp), lambda i: (i, 0)),
        compiler_params=pltpu.CompilerParams(
            dimension_semantics=("parallel",),
            vmem_limit_bytes=vmem_limit,
        ),
    )(y_mat, scale_shift)

    # ---- glue: strip padding, back to NCHW --------------------------------
    out = out_mat[:M, :Cout].reshape(N, Ho, Wo, Cout)
    return jnp.transpose(out, (0, 3, 1, 2))


def _reference(x_nchw, w_oihw, gamma, beta, stride):
    """Pure-JAX reference matching PyTorch conv -> BN(train) -> ReLU."""
    y = jax.lax.conv_general_dilated(
        x_nchw, w_oihw, window_strides=(stride, stride),
        padding=((1, 1), (1, 1)),
        dimension_numbers=("NCHW", "OIHW", "NCHW"),
        precision=jax.lax.Precision.HIGHEST)
    mean = jnp.mean(y, axis=(0, 2, 3), keepdims=True)
    var = jnp.mean((y - mean) ** 2, axis=(0, 2, 3), keepdims=True)
    y_hat = (y - mean) * jax.lax.rsqrt(var + BN_EPS)
    out = y_hat * gamma.reshape(1, -1, 1, 1) + beta.reshape(1, -1, 1, 1)
    return jnp.maximum(out, 0.0)


if __name__ == "__main__":
    # Small shapes consistent with the module: conv_bn(inp=4, oup=8, stride=2)
    N, Cin, H, W = 2, 4, 16, 16
    Cout, stride = 8, 2

    key = jax.random.PRNGKey(0)
    kx, kw = jax.random.split(key)

    x = jax.random.normal(kx, (N, Cin, H, W), dtype=jnp.float32)
    # Deterministic synthetic conv weight (PyTorch shape: Cout, Cin, 3, 3).
    w = jax.random.normal(kw, (Cout, Cin, 3, 3), dtype=jnp.float32) * 0.1
    # nn.BatchNorm2d default init: weight=1, bias=0.
    gamma = jnp.ones((Cout,), dtype=jnp.float32)
    beta = jnp.zeros((Cout,), dtype=jnp.float32)

    # tm=64 so the small test exercises the multi-tile accumulation path.
    y = conv_bn_forward(x, w, gamma, beta, stride, tm=64)
    y = jax.block_until_ready(y)

    assert y.shape == (N, Cout, H // stride, W // stride), y.shape

    y_ref = jax.block_until_ready(_reference(x, w, gamma, beta, stride))
    assert jnp.allclose(y, y_ref, rtol=5e-3, atol=5e-3), \
        float(jnp.max(jnp.abs(y - y_ref)))

    print("KERNEL_OK")
</pallas_src>

<mosaic_0001>
module attributes {stable_mosaic.version = 11 : i64} {
  func.func @conv_stats_kernel(%arg0: i32, %arg1: memref<64x128xf32, #tpu.memory_space<vmem>>, %arg2: memref<128x128xf32, #tpu.memory_space<vmem>>, %arg3: memref<1x128xf32, #tpu.memory_space<vmem>>, %arg4: memref<1x128xf32, #tpu.memory_space<vmem>>, %arg5: memref<64x128xf32, #tpu.memory_space<vmem>>, %arg6: memref<2x128xf32, #tpu.memory_space<vmem>>, %arg7: memref<1x128xf32, #tpu.memory_space<vmem>>, %arg8: memref<1x128xf32, #tpu.memory_space<vmem>>) attributes {dimension_semantics = [#tpu.dimension_semantics<arbitrary>], iteration_bounds = array<i64: 2>, scalar_prefetch = 0 : i64, scratch_operands = 2 : i64, tpu.core_type = #tpu.core_type<tc>, window_params = [{transform_indices = @transform_0, window_bounds = array<i64: 64, 128>}, {pipeline_mode = #tpu.pipeline_mode<synchronous>, transform_indices = @transform_1, window_bounds = array<i64: 128, 128>}, {pipeline_mode = #tpu.pipeline_mode<synchronous>, transform_indices = @transform_2, window_bounds = array<i64: 1, 128>}, {pipeline_mode = #tpu.pipeline_mode<synchronous>, transform_indices = @transform_3, window_bounds = array<i64: 1, 128>}, {transform_indices = @transform_4, window_bounds = array<i64: 64, 128>}, {pipeline_mode = #tpu.pipeline_mode<synchronous>, transform_indices = @transform_5, window_bounds = array<i64: 2, 128>}]} {
    %c0_i32 = arith.constant 0 : i32
    %0 = arith.cmpi eq, %arg0, %c0_i32 : i32
    %1 = arith.extui %0 : i1 to i32
    %c0_i32_0 = arith.constant 0 : i32
    %2 = arith.cmpi ne, %1, %c0_i32_0 : i32
    scf.if %2 {
      %cst_17 = arith.constant 0.000000e+00 : f32
      %21 = vector.broadcast %cst_17 : f32 to vector<1x128xf32>
      %c0_18 = arith.constant 0 : index
      %c0_19 = arith.constant 0 : index
      %22 = vector.load %arg7[%c0_18, %c0_19] : memref<1x128xf32, #tpu.memory_space<vmem>>, vector<1x128xf32>
      tpu.vector_store %arg7[%c0_18, %c0_19], %21 {strides = array<i32>} : memref<1x128xf32, #tpu.memory_space<vmem>>, vector<1x128xf32>,
      %cst_20 = arith.constant 0.000000e+00 : f32
      %23 = vector.broadcast %cst_20 : f32 to vector<1x128xf32>
      %c0_21 = arith.constant 0 : index
      %c0_22 = arith.constant 0 : index
      %24 = vector.load %arg8[%c0_21, %c0_22] : memref<1x128xf32, #tpu.memory_space<vmem>>, vector<1x128xf32>
      tpu.vector_store %arg8[%c0_21, %c0_22], %23 {strides = array<i32>} : memref<1x128xf32, #tpu.memory_space<vmem>>, vector<1x128xf32>,
    } else {
    }
    %c0 = arith.constant 0 : index
    %c0_1 = arith.constant 0 : index
    %3 = vector.load %arg1[%c0, %c0_1] : memref<64x128xf32, #tpu.memory_space<vmem>>, vector<64x128xf32>
    %c0_2 = arith.constant 0 : index
    %c0_3 = arith.constant 0 : index
    %4 = vector.load %arg2[%c0_2, %c0_3] : memref<128x128xf32, #tpu.memory_space<vmem>>, vector<128x128xf32>
    %cst = arith.constant dense<0.000000e+00> : vector<64x128xf32>
    %5 = tpu.matmul %3, %4, %cst {dimension_numbers = #tpu.dot_dimension_numbers<[1], [0], [0], [1], [0, 0, 1, 1], [], []>} : vector<64x128xf32>, vector<128x128xf32>, vector<64x128xf32> -> vector<64x128xf32>
    %c0_4 = arith.constant 0 : index
    %c0_5 = arith.constant 0 : index
    %6 = vector.load %arg5[%c0_4, %c0_5] : memref<64x128xf32, #tpu.memory_space<vmem>>, vector<64x128xf32>
    tpu.vector_store %arg5[%c0_4, %c0_5], %5 {strides = array<i32>} : memref<64x128xf32, #tpu.memory_space<vmem>>, vector<64x128xf32>,
    %c0_6 = arith.constant 0 : index
    %c0_7 = arith.constant 0 : index
    %7 = vector.load %arg7[%c0_6, %c0_7] : memref<1x128xf32, #tpu.memory_space<vmem>>, vector<1x128xf32>
    %cst_8 = arith.constant dense<0.000000e+00> : vector<128xf32>
    %8 = vector.multi_reduction <add>, %5, %cst_8 [0] : vector<64x128xf32> to vector<128xf32>
    %9 = vector.shape_cast %8 : vector<128xf32> to vector<1x128xf32>
    %10 = arith.addf %7, %9 : vector<1x128xf32>
    %c0_9 = arith.constant 0 : index
    %c0_10 = arith.constant 0 : index
    %11 = vector.load %arg7[%c0_9, %c0_10] : memref<1x128xf32, #tpu.memory_space<vmem>>, vector<1x128xf32>
    tpu.vector_store %arg7[%c0_9, %c0_10], %10 {strides = array<i32>} : memref<1x128xf32, #tpu.memory_space<vmem>>, vector<1x128xf32>,
    %c0_11 = arith.constant 0 : index
    %c0_12 = arith.constant 0 : index
    %12 = vector.load %arg8[%c0_11, %c0_12] : memref<1x128xf32, #tpu.memory_space<vmem>>, vector<1x128xf32>
    %13 = arith.mulf %5, %5 : vector<64x128xf32>
    %cst_13 = arith.constant dense<0.000000e+00> : vector<128xf32>
    %14 = vector.multi_reduction <add>, %13, %cst_13 [0] : vector<64x128xf32> to vector<128xf32>
    %15 = vector.shape_cast %14 : vector<128xf32> to vector<1x128xf32>
    %16 = arith.addf %12, %15 : vector<1x128xf32>
    %c0_14 = arith.constant 0 : index
    %c0_15 = arith.constant 0 : index
    %17 = vector.load %arg8[%c0_14, %c0_15] : memref<1x128xf32, #tpu.memory_space<vmem>>, vector<1x128xf32>
    tpu.vector_store %arg8[%c0_14, %c0_15], %16 {strides = array<i32>} : memref<1x128xf32, #tpu.memory_space<vmem>>, vector<1x128xf32>,
    %c1_i32 = arith.constant 1 : i32
    %18 = arith.cmpi eq, %arg0, %c1_i32 : i32
    %19 = arith.extui %18 : i1 to i32
    %c0_i32_16 = arith.constant 0 : i32
    %20 = arith.cmpi ne, %19, %c0_i32_16 : i32
    scf.if %20 {
      %c0_17 = arith.constant 0 : index
      %c0_18 = arith.constant 0 : index
      %21 = vector.load %arg7[%c0_17, %c0_18] : memref<1x128xf32, #tpu.memory_space<vmem>>, vector<1x128xf32>
      %cst_19 = arith.constant 7.812500e-03 : f32
      %22 = vector.broadcast %cst_19 : f32 to vector<1x128xf32>
      %23 = arith.mulf %21, %22 : vector<1x128xf32>
      %c0_20 = arith.constant 0 : index
      %c0_21 = arith.constant 0 : index
      %24 = vector.load %arg8[%c0_20, %c0_21] : memref<1x128xf32, #tpu.memory_space<vmem>>, vector<1x128xf32>
      %cst_22 = arith.constant 7.812500e-03 : f32
      %25 = vector.broadcast %cst_22 : f32 to vector<1x128xf32>
      %26 = arith.mulf %24, %25 : vector<1x128xf32>
      %27 = arith.mulf %23, %23 : vector<1x128xf32>
      %28 = arith.subf %26, %27 : vector<1x128xf32>
      %c0_23 = arith.constant 0 : index
      %c0_24 = arith.constant 0 : index
      %29 = vector.load %arg3[%c0_23, %c0_24] : memref<1x128xf32, #tpu.memory_space<vmem>>, vector<1x128xf32>
      %cst_25 = arith.constant 9.99999974E-6 : f32
      %30 = vector.broadcast %cst_25 : f32 to vector<1x128xf32>
      %31 = arith.addf %28, %30 : vector<1x128xf32>
      %32 = math.rsqrt %31 : vector<1x128xf32>
      %33 = arith.mulf %29, %32 : vector<1x128xf32>
      %c0_26 = arith.constant 0 : index
      %c0_27 = arith.constant 0 : index
      %34 = vector.load %arg4[%c0_26, %c0_27] : memref<1x128xf32, #tpu.memory_space<vmem>>, vector<1x128xf32>
      %35 = arith.mulf %23, %33 : vector<1x128xf32>
      %36 = arith.subf %34, %35 : vector<1x128xf32>
      %37 = tpu.concatenate %33, %36 in 0 : vector<1x128xf32>, vector<1x128xf32> -> vector<2x128xf32>
      %c0_28 = arith.constant 0 : index
      %c0_29 = arith.constant 0 : index
      %38 = vector.load %arg6[%c0_28, %c0_29] : memref<2x128xf32, #tpu.memory_space<vmem>>, vector<2x128xf32>
      tpu.vector_store %arg6[%c0_28, %c0_29], %37 {strides = array<i32>} : memref<2x128xf32, #tpu.memory_space<vmem>>, vector<2x128xf32>,
    } else {
    }
    return
  }
  func.func @transform_0(%arg0: i32) -> (i32, i32) {
    %c0_i32 = arith.constant 0 : i32
    %c0_i32_0 = arith.constant 0 : i32
    return %arg0, %c0_i32 : i32, i32
  }
  func.func @transform_1(%arg0: i32) -> (i32, i32) {
    %c0_i32 = arith.constant 0 : i32
    %c0_i32_0 = arith.constant 0 : i32
    %c0_i32_1 = arith.constant 0 : i32
    return %c0_i32, %c0_i32_0 : i32, i32
  }
  func.func @transform_2(%arg0: i32) -> (i32, i32) {
    %c0_i32 = arith.constant 0 : i32
    %c0_i32_0 = arith.constant 0 : i32
    %c0_i32_1 = arith.constant 0 : i32
    return %c0_i32, %c0_i32_0 : i32, i32
  }
  func.func @transform_3(%arg0: i32) -> (i32, i32) {
    %c0_i32 = arith.constant 0 : i32
    %c0_i32_0 = arith.constant 0 : i32
    %c0_i32_1 = arith.constant 0 : i32
    return %c0_i32, %c0_i32_0 : i32, i32
  }
  func.func @transform_4(%arg0: i32) -> (i32, i32) {
    %c0_i32 = arith.constant 0 : i32
    %c0_i32_0 = arith.constant 0 : i32
    return %arg0, %c0_i32 : i32, i32
  }
  func.func @transform_5(%arg0: i32) -> (i32, i32) {
    %c0_i32 = arith.constant 0 : i32
    %c0_i32_0 = arith.constant 0 : i32
    %c0_i32_1 = arith.constant 0 : i32
    return %c0_i32, %c0_i32_0 : i32, i32
  }
}

</mosaic_0001>

<llo_original>
// kernel: tpu_custom_call.1
$region0: #{tpu_custom_call.1}
  #allocation0 [shape = 'u32[]', space=smem, size = 0x4, offset = 0x4, fixed_abs, tag = 'smem constant byte address 0x4 - core index']
  #allocation1 [shape = 'u32[144,128]{1,0:T(1,128)}', space=vmem, size = 0x12000, scoped, tag = 'internal scratch']
  #allocation2 [shape = 'f32[1,128]{1,0:T(1,128)}', space=vmem, size = 0x200, scoped, tag = 'scratch operand']
  #allocation3 [shape = 'f32[1,128]{1,0:T(1,128)}', space=vmem, size = 0x200, scoped, tag = 'scratch operand']
  %s0 = inlined_call_operand.hbm [shape: f32[128,128], index: 0, kind: input, shape index: {}]
  %s1 = inlined_call_operand.hbm [shape: f32[128,128], index: 1, kind: input, shape index: {}]
  %s2 = inlined_call_operand.vmem [shape: f32[1,128], index: 2, kind: input, shape index: {}]
  %s3 = inlined_call_operand.vmem [shape: f32[1,128], index: 3, kind: input, shape index: {}]
  %s4 = inlined_call_operand.hbm [shape: f32[128,128], index: 4, kind: output, shape index: {0}]
  %s5 = inlined_call_operand.hbm [shape: f32[2,128], index: 5, kind: output, shape index: {1}]
  %6 = xla_tuple %s4, %s5
  %s7 = sld [smem:[#allocation0]]
  $region73: #{tpu_custom_call.1} parent=0
    _
  %s9 = ssub.s32 1, %s7
  %s10 = scalar_select 0, %s9, %s7
  $region1: #{tpu_custom_call.1} parent=0
    #allocation4 [shape = 'u8[65536]{0}', space=vmem, size = 0x10000, scoped, tag = 'input window, operand 0']
    #allocation5 [shape = 's32[2]{0}', space=sflag, size = 0x8, scoped, tag = 'scoped memory for tpu_custom_call.1']
    #allocation6 [shape = 's32[2]{0}', space=sflag, size = 0x8, scoped, tag = 'scoped memory for tpu_custom_call.1']
    #allocation7 [shape = 'u8[65536]{0}', space=vmem, size = 0x10000, scoped, tag = 'input window, operand 1, single buffered']
    #allocation8 [shape = 's32[1]{0}', space=sflag, size = 0x4, scoped, tag = 'scoped memory for tpu_custom_call.1']
    #allocation9 [shape = 'u8[65536]{0}', space=vmem, size = 0x10000, scoped, tag = 'output window, operand 0']
    #allocation10 [shape = 'u8[1024]{0}', space=vmem, size = 0x400, scoped, tag = 'output window, operand 1, single buffered']
    #allocation11 [shape = 's32[1]{0}', space=sflag, size = 0x4, scoped, tag = 'scoped memory for tpu_custom_call.1']
    %11 = vsyncpa [#allocation5], 0
    %s12 = scalar_lea.sflag [#allocation5], 1
    %13 = vsyncpa %s12, 0
    %14 = vsyncpa [#allocation8], 0
    %15 = vsyncpa [#allocation6], 0
    %s16 = scalar_lea.sflag [#allocation6], 1
    %17 = vsyncpa %s16, 0
    %18 = vsyncpa [#allocation11], 0
    loop: start=0, step=1, limit=4
    $region2: #{tpu_custom_call.1} parent=1 // loop_pre_header
      _
    $region3: #{tpu_custom_call.1} parent=1 // loop_header
      %s20 = sphi 0, %s24
      %p21 = scmp.ge.s32.totalorder %s20, 4
      %s30 = sphi 0, %s32
      %s33 = sphi 0, %s30
      %s34 = sphi 0, %s33
      %s50 = sphi 0, %s34
      %s54 = sphi 0, %s54
      %s56 = sphi 0, %s54
      %s57 = sphi 0, %s56
      %s71 = sphi 0, %s57
      %s75 = sphi 0, %s75
      %s77 = sphi 0, %s75
      %s78 = sphi 0, %s77
      %s92 = sphi 0, %s78
      %s96 = sphi 0, %s96
      %s98 = sphi 0, %s96
      %s99 = sphi 0, %s98
      %s113 = sphi 0, %s99
      %s119 = sphi 0, %s121
      %s122 = sphi 0, %s119
      %s123 = sphi 0, %s122
      %s139 = sphi 0, %s123
      %s143 = sphi 0, %s143
      %s145 = sphi 0, %s143
      %s146 = sphi 0, %s145
      %s160 = sphi 0, %s146
    $region4: #{tpu_custom_call.1} parent=1 // loop_header_branch
      %23 = sbr.rel (%p21) target = $region8
    $region5: #{tpu_custom_call.1} parent=1 // loop_body
      %s25 = ssub.s32 %s20, 1
      %s26 = ssub.s32 %s20, 2
      %s27 = sadd.s32 %s20, 1
      %s28 = ssub.s32 %s20, %s27
      %p29 = scmp.eq.s32.totalorder %s28, 0
      %s31 = sadd.s32 %s30, 1
      %s32 = scalar_select %p29, %s30, %s31
      %p35 = pneg %p29
      %p36 = scmp.eq.s32.totalorder %s20, 1
      %p37 = por %p35, %p36
      %p38 = scmp.ne.s32.totalorder %s30, %s33
      %p39 = scmp.eq.s32.totalorder %s20, 0
      %p40 = por %p38, %p39
      %p41 = scmp.ne.s32.totalorder %s30, %s33
      %p42 = scmp.eq.s32.totalorder %s25, 1
      %p43 = por %p41, %p42
      %p44 = scmp.ne.s32.totalorder %s33, %s34
      %p45 = scmp.eq.s32.totalorder %s25, 0
      %p46 = por %p44, %p45
      %p47 = scmp.ne.s32.totalorder %s33, %s34
      %p48 = scmp.eq.s32.totalorder %s26, 1
      %p49 = por %p47, %p48
      %p51 = scmp.ne.s32.totalorder %s34, %s50
      %p52 = scmp.eq.s32.totalorder %s26, 0
      %p53 = por %p51, %p52
      %s55 = sadd.s32 %s54, 1
      %p58 = scmp.eq.s32.totalorder %s20, 1
      %p59 = scmp.ne.s32.totalorder %s54, %s56
      %p60 = scmp.eq.s32.totalorder %s20, 0
      %p61 = por %p59, %p60
      %p62 = scmp.ne.s32.totalorder %s54, %s56
      %p63 = scmp.eq.s32.totalorder %s25, 1
      %p64 = por %p62, %p63
      %p65 = scmp.ne.s32.totalorder %s56, %s57
      %p66 = scmp.eq.s32.totalorder %s25, 0
      %p67 = por %p65, %p66
      %p68 = scmp.ne.s32.totalorder %s56, %s57
      %p69 = scmp.eq.s32.totalorder %s26, 1
      %p70 = por %p68, %p69
      %p72 = scmp.ne.s32.totalorder %s57, %s71
      %p73 = scmp.eq.s32.totalorder %s26, 0
      %p74 = por %p72, %p73
      %s76 = sadd.s32 %s75, 1
      %p79 = scmp.eq.s32.totalorder %s20, 1
      %p80 = scmp.ne.s32.totalorder %s75, %s77
      %p81 = scmp.eq.s32.totalorder %s20, 0
      %p82 = por %p80, %p81
      %p83 = scmp.ne.s32.totalorder %s75, %s77
      %p84 = scmp.eq.s32.totalorder %s25, 1
      %p85 = por %p83, %p84
      %p86 = scmp.ne.s32.totalorder %s77, %s78
      %p87 = scmp.eq.s32.totalorder %s25, 0
      %p88 = por %p86, %p87
      %p89 = scmp.ne.s32.totalorder %s77, %s78
      %p90 = scmp.eq.s32.totalorder %s26, 1
      %p91 = por %p89, %p90
      %p93 = scmp.ne.s32.totalorder %s78, %s92
      %p94 = scmp.eq.s32.totalorder %s26, 0
      %p95 = por %p93, %p94
      %s97 = sadd.s32 %s96, 1
      %p100 = scmp.eq.s32.totalorder %s20, 1
      %p101 = scmp.ne.s32.totalorder %s96, %s98
      %p102 = scmp.eq.s32.totalorder %s20, 0
      %p103 = por %p101, %p102
      %p104 = scmp.ne.s32.totalorder %s96, %s98
      %p105 = scmp.eq.s32.totalorder %s25, 1
      %p106 = por %p104, %p105
      %p107 = scmp.ne.s32.totalorder %s98, %s99
      %p108 = scmp.eq.s32.totalorder %s25, 0
      %p109 = por %p107, %p108
      %p110 = scmp.ne.s32.totalorder %s98, %s99
      %p111 = scmp.eq.s32.totalorder %s26, 1
      %p112 = por %p110, %p111
      %p114 = scmp.ne.s32.totalorder %s99, %s113
      %p115 = scmp.eq.s32.totalorder %s26, 0
      %p116 = por %p114, %p115
      %s117 = ssub.s32 %s20, %s27
      %p118 = scmp.eq.s32.totalorder %s117, 0
      %s120 = sadd.s32 %s119, 1
      %s121 = scalar_select %p118, %s119, %s120
      %p124 = pneg %p118
      %p125 = scmp.eq.s32.totalorder %s20, 1
      %p126 = por %p124, %p125
      %p127 = scmp.ne.s32.totalorder %s119, %s122
      %p128 = scmp.eq.s32.totalorder %s20, 0
      %p129 = por %p127, %p128
      %p130 = scmp.ne.s32.totalorder %s119, %s122
      %p131 = scmp.eq.s32.totalorder %s25, 1
      %p132 = por %p130, %p131
      %p133 = scmp.ne.s32.totalorder %s122, %s123
      %p134 = scmp.eq.s32.totalorder %s25, 0
      %p135 = por %p133, %p134
      %p136 = scmp.ne.s32.totalorder %s122, %s123
      %p137 = scmp.eq.s32.totalorder %s26, 1
      %p138 = por %p136, %p137
      %p140 = scmp.ne.s32.totalorder %s123, %s139
      %p141 = scmp.eq.s32.totalorder %s26, 0
      %p142 = por %p140, %p141
      %s144 = sadd.s32 %s143, 1
      %p147 = scmp.eq.s32.totalorder %s20, 1
      %p148 = scmp.ne.s32.totalorder %s143, %s145
      %p149 = scmp.eq.s32.totalorder %s20, 0
      %p150 = por %p148, %p149
      %p151 = scmp.ne.s32.totalorder %s143, %s145
      %p152 = scmp.eq.s32.totalorder %s25, 1
      %p153 = por %p151, %p152
      %p154 = scmp.ne.s32.totalorder %s145, %s146
      %p155 = scmp.eq.s32.totalorder %s25, 0
      %p156 = por %p154, %p155
      %p157 = scmp.ne.s32.totalorder %s145, %s146
      %p158 = scmp.eq.s32.totalorder %s26, 1
      %p159 = por %p157, %p158
      %p161 = scmp.ne.s32.totalorder %s146, %s160
      %p162 = scmp.eq.s32.totalorder %s26, 0
      %p163 = por %p161, %p162
      %p164 = scmp.le.s32.totalorder 1, %s20
      %p165 = scmp.lt.s32.totalorder %s20, 3
      %p166 = pnand %p164, %p165
      %p167 = pneg %p166
      // Predicated region
      $region9: #{tpu_custom_call.1} parent=5 // pred_check
        _
      $region10: #{tpu_custom_call.1} parent=5 // pred_check_branch
        %169 = sbr.rel (%p166) target = $region12
      $region11: #{tpu_custom_call.1} parent=5 // pred_region
        %s170 = ssub.s32 %s20, 1
        // Predicated region
        $region13: #{tpu_custom_call.1} parent=11 // pred_check
          %p171 = pneg %p67
        $region14: #{tpu_custom_call.1} parent=11 // pred_check_branch
          %173 = sbr.rel (%p171) target = $region16
        $region15: #{tpu_custom_call.1} parent=11 // pred_region
          %s175 = ssub.s32 2048, 2048
          %176 = vsyncadd [#allocation8], %s175
          %s177 = sshll.u32 [#allocation7], 4
          %s178 = int_to_ptr.vmem [resolvable:$true] %s177
          %183 = dma.hbm_to_vmem [thread:$0]  %s1, 2048, %s178, [#allocation8], 128, 128, 8
        $region16: #{tpu_custom_call.1} parent=11 // pred_fallthru
          _
        // Predicated region
        $region17: #{tpu_custom_call.1} parent=11 // pred_check
          %p184 = pneg %p88
        $region18: #{tpu_custom_call.1} parent=11 // pred_check_branch
          %186 = sbr.rel (%p184) target = $region20
        $region19: #{tpu_custom_call.1} parent=11 // pred_region
          _
        $region20: #{tpu_custom_call.1} parent=11 // pred_fallthru
          _
        // Predicated region
        $region21: #{tpu_custom_call.1} parent=11 // pred_check
          %p187 = pneg %p109
        $region22: #{tpu_custom_call.1} parent=11 // pred_check_branch
          %189 = sbr.rel (%p187) target = $region24
        $region23: #{tpu_custom_call.1} parent=11 // pred_region
          _
        $region24: #{tpu_custom_call.1} parent=11 // pred_fallthru
          _
      $region12: #{tpu_custom_call.1} parent=5 // pred_fallthru
        _
      %p190 = scmp.lt.s32.totalorder %s20, 2
      // Predicated region
      $region25: #{tpu_custom_call.1} parent=5 // pred_check
        %p191 = pneg %p190
      $region26: #{tpu_custom_call.1} parent=5 // pred_check_branch
        %193 = sbr.rel (%p191) target = $region28
      $region27: #{tpu_custom_call.1} parent=5 // pred_region
        // Predicated region
        $region29: #{tpu_custom_call.1} parent=27 // pred_check
          %p194 = pneg %p40
        $region30: #{tpu_custom_call.1} parent=27 // pred_check_branch
          %196 = sbr.rel (%p194) target = $region32
        $region31: #{tpu_custom_call.1} parent=27 // pred_region
          %s197 = sand.u32 %s30, 1
          %s198 = scalar_lea.sflag [#allocation5], %s197
          %s199 = sand.u32 %s30, 1
          %s200 = smul.addr %s199, 64
          %s201 = scalar_lea.vmem [#allocation4], %s200
          %s202 = smul.u32 8, %s20
          %s204 = ssub.s32 1024, 1024
          %205 = vsyncadd %s198, %s204
          %s206 = smul.addr %s202, 128
          %s207 = scalar_lea.hbm %s0, %s206
          %s208 = sshll.u32 %s201, 4
          %s209 = int_to_ptr.vmem [resolvable:$true] %s208
          %214 = dma.hbm_to_vmem [thread:$0]  %s207, 1024, %s209, %s198, 128, 128, 8
        $region32: #{tpu_custom_call.1} parent=27 // pred_fallthru
          _
      $region28: #{tpu_custom_call.1} parent=5 // pred_fallthru
        _
      %p215 = scmp.le.s32.totalorder 1, %s20
      %p216 = scmp.lt.s32.totalorder %s20, 3
      %p217 = pnand %p215, %p216
      %p218 = pneg %p217
      // Predicated region
      $region33: #{tpu_custom_call.1} parent=5 // pred_check
        _
      $region34: #{tpu_custom_call.1} parent=5 // pred_check_branch
        %220 = sbr.rel (%p217) target = $region36
      $region35: #{tpu_custom_call.1} parent=5 // pred_region
        %s221 = ssub.s32 %s20, 1
        %s222 = sand.u32 %s33, 1
        %s223 = scalar_lea.sflag [#allocation5], %s222
        %s224 = sand.u32 %s33, 1
        %s225 = smul.addr %s224, 64
        %s226 = scalar_lea.vmem [#allocation4], %s225
        // Predicated region
        $region37: #{tpu_custom_call.1} parent=35 // pred_check
          %p227 = pneg %p46
        $region38: #{tpu_custom_call.1} parent=35 // pred_check_branch
          %229 = sbr.rel (%p227) target = $region40
        $region39: #{tpu_custom_call.1} parent=35 // pred_region
          %230 = dma.done %s223, 1024
        $region40: #{tpu_custom_call.1} parent=35 // pred_fallthru
          _
        // Predicated region
        $region41: #{tpu_custom_call.1} parent=35 // pred_check
          %p231 = pneg %p67
        $region42: #{tpu_custom_call.1} parent=35 // pred_check_branch
          %233 = sbr.rel (%p231) target = $region44
        $region43: #{tpu_custom_call.1} parent=35 // pred_region
          %234 = dma.done [#allocation8], 2048
        $region44: #{tpu_custom_call.1} parent=35 // pred_fallthru
          _
        %s235 = sand.u32 %s33, 1
        %s236 = scalar_lea.sflag [#allocation5], %s235
        %s237 = sand.u32 %s33, 1
        %s238 = smul.addr %s237, 64
        %s239 = scalar_lea.vmem [#allocation4], %s238
        %p240 = pneg %p46
        %p241 = pneg %p43
        %p242 = pneg %p67
        %p243 = pneg %p64
        %p244 = pneg %p88
        %p245 = pneg %p85
        %p246 = pneg %p109
        %p247 = pneg %p106
        %p248 = pneg %p135
        %p249 = pneg %p132
        %s250 = sand.u32 %s122, 1
        %s251 = scalar_lea.sflag [#allocation6], %s250
        %s252 = sand.u32 %s122, 1
        %s253 = smul.addr %s252, 64
        %s254 = scalar_lea.vmem [#allocation9], %s253
        %p255 = pneg %p156
        %p256 = pneg %p153
        %s257 = smul.u32 8, %s25
        %s258 = smul.u32 8, %s25
        %p259 = scmp.eq.s32.totalorder %s25, 0
        // Predicated region
        $region45: #{tpu_custom_call.1} parent=35 // pred_check
          %p260 = pneg %p259
        $region46: #{tpu_custom_call.1} parent=35 // pred_check_branch
          %262 = sbr.rel (%p260) target = $region48
        $region47: #{tpu_custom_call.1} parent=35 // pred_region
          %263 = vst [vmem:[#allocation2] sm:$0x1] 0.0
          %264 = vst [vmem:[#allocation3] sm:$0x1] 0.0
        $region48: #{tpu_custom_call.1} parent=35 // pred_fallthru
          _
        %v265 = vld [vmem:[%s226] sm:$0xff]
        %v266 = vld [vmem:[%s226 + $0x8] sm:$0xff]
        %v267 = vld [vmem:[%s226 + $0x10] sm:$0xff]
        %v268 = vld [vmem:[%s226 + $0x18] sm:$0xff]
        %v269 = vld [vmem:[%s226 + $0x20] sm:$0xff]
        %v270 = vld [vmem:[%s226 + $0x28] sm:$0xff]
        %v271 = vld [vmem:[%s226 + $0x30] sm:$0xff]
        %v272 = vld [vmem:[%s226 + $0x38] sm:$0xff]
        %v273 = vld [vmem:[#allocation7] sm:$0xff]
        %v274 = vld [vmem:[#allocation7 + $0x8] sm:$0xff]
        %v275 = vld [vmem:[#allocation7 + $0x10] sm:$0xff]
        %v276 = vld [vmem:[#allocation7 + $0x18] sm:$0xff]
        %v277 = vld [vmem:[#allocation7 + $0x20] sm:$0xff]
        %v278 = vld [vmem:[#allocation7 + $0x28] sm:$0xff]
        %v279 = vld [vmem:[#allocation7 + $0x30] sm:$0xff]
        %v280 = vld [vmem:[#allocation7 + $0x38] sm:$0xff]
        %v281 = vld [vmem:[#allocation7 + $0x40] sm:$0xff]
        %v282 = vld [vmem:[#allocation7 + $0x48] sm:$0xff]
        %v283 = vld [vmem:[#allocation7 + $0x50] sm:$0xff]
        %v284 = vld [vmem:[#allocation7 + $0x58] sm:$0xff]
        %v285 = vld [vmem:[#allocation7 + $0x60] sm:$0xff]
        %v286 = vld [vmem:[#allocation7 + $0x68] sm:$0xff]
        %v287 = vld [vmem:[#allocation7 + $0x70] sm:$0xff]
        %v288 = vld [vmem:[#allocation7 + $0x78] sm:$0xff]
        %289 = vmatprep.subr.mxu0 0.0
        %290 = vmatpush1.msra.mxu0 %v273
        %291 = vmatprep.subr.mxu0 0.0
        %292 = vmatpush1.msra.mxu0 %v274
        %293 = vmatprep.subr.mxu0 0.0
        %294 = vmatpush1.msra.mxu0 %v275
        %295 = vmatprep.subr.mxu0 0.0
        %296 = vmatpush1.msra.mxu0 %v276
        %297 = vmatprep.subr.mxu0 0.0
        %298 = vmatpush1.msra.mxu0 %v277
        %299 = vmatprep.subr.mxu0 0.0
        %300 = vmatpush1.msra.mxu0 %v278
        %301 = vmatprep.subr.mxu0 0.0
        %302 = vmatpush1.msra.mxu0 %v279
        %303 = vmatprep.subr.mxu0 0.0
        %304 = vmatpush1.msra.mxu0 %v280
        %305 = vmatprep.subr.mxu0 0.0
        %306 = vmatpush1.msra.mxu0 %v281
        %307 = vmatprep.subr.mxu0 0.0
        %308 = vmatpush1.msra.mxu0 %v282
        %309 = vmatprep.subr.mxu0 0.0
        %310 = vmatpush1.msra.mxu0 %v283
        %311 = vmatprep.subr.mxu0 0.0
        %312 = vmatpush1.msra.mxu0 %v284
        %313 = vmatprep.subr.mxu0 0.0
        %314 = vmatpush1.msra.mxu0 %v285
        %315 = vmatprep.subr.mxu0 0.0
        %316 = vmatpush1.msra.mxu0 %v286
        %317 = vmatprep.subr.mxu0 0.0
        %318 = vmatpush1.msra.mxu0 %v287
        %319 = vmatprep.subr.mxu0 0.0
        %320 = vmatpush1.msra.mxu0 %v288
        %321 = vmatprep.subr.mxu0 0.0
        %322 = vmatpush1.msra.mxu0 0.0
        %323 = vmatprep.subr.mxu0 0.0
        %324 = vmatpush1.msra.mxu0 0.0
        %325 = vmatprep.subr.mxu0 0.0
        %326 = vmatpush1.msra.mxu0 0.0
        %327 = vmatprep.subr.mxu0 0.0
        %328 = vmatpush1.msra.mxu0 0.0
        %329 = vmatprep.subr.mxu0 0.0
        %330 = vmatpush1.msra.mxu0 0.0
        %331 = vmatprep.subr.mxu0 0.0
        %332 = vmatpush1.msra.mxu0 0.0
        %333 = vmatprep.subr.mxu0 0.0
        %334 = vmatpush1.msra.mxu0 0.0
        %335 = vmatprep.subr.mxu0 0.0
        %336 = vmatpush1.msra.mxu0 0.0
        %337 = vmatprep.subr.mxu0 0.0
        %338 = vmatpush1.msra.mxu0 0.0
        %339 = vmatprep.subr.mxu0 0.0
        %340 = vmatpush1.msra.mxu0 0.0
        %341 = vmatprep.subr.mxu0 0.0
        %342 = vmatpush1.msra.mxu0 0.0
        %343 = vmatprep.subr.mxu0 0.0
        %344 = vmatpush1.msra.mxu0 0.0
        %345 = vmatprep.subr.mxu0 0.0
        %346 = vmatpush1.msra.mxu0 0.0
        %347 = vmatprep.subr.mxu0 0.0
        %348 = vmatpush1.msra.mxu0 0.0
        %349 = vmatprep.subr.mxu0 0.0
        %350 = vmatpush1.msra.mxu0 0.0
        %351 = vmatprep.subr.mxu0 0.0
        %352 = vmatpush1.msra.mxu0 0.0
        %353 = vmatprep.mubr.f32.mxu0 0.0
        %354 = vmatmul.mubr.f32.gmra.mrb[0].mxu0 %v265
        %v355 = vpop.f32.mrb[0].mxu0
        %v356 = vadd.f32 0.0, %v355
        %v357 = vpop.f32.mrb[0].mxu0
        %358 = vmatprep.mubr.f32.mxu0 0.0
        %359 = vmatmul.mubr.f32.gmra.mrb[0].mxu0 %v266
        %v360 = vpop.f32.mrb[0].mxu0
        %v361 = vadd.f32 0.0, %v360
        %v362 = vpop.f32.mrb[0].mxu0
        %363 = vmatprep.mubr.f32.mxu0 0.0
        %364 = vmatmul.mubr.f32.gmra.mrb[0].mxu0 %v267
        %v365 = vpop.f32.mrb[0].mxu0
        %v366 = vadd.f32 0.0, %v365
        %v367 = vpop.f32.mrb[0].mxu0
        %368 = vmatprep.mubr.f32.mxu0 0.0
        %369 = vmatmul.mubr.f32.gmra.mrb[0].mxu0 %v268
        %v370 = vpop.f32.mrb[0].mxu0
        %v371 = vadd.f32 0.0, %v370
        %v372 = vpop.f32.mrb[0].mxu0
        %373 = vmatprep.mubr.f32.mxu0 0.0
        %374 = vmatmul.mubr.f32.gmra.mrb[0].mxu0 %v269
        %v375 = vpop.f32.mrb[0].mxu0
        %v376 = vadd.f32 0.0, %v375
        %v377 = vpop.f32.mrb[0].mxu0
        %378 = vmatprep.mubr.f32.mxu0 0.0
        %379 = vmatmul.mubr.f32.gmra.mrb[0].mxu0 %v270
        %v380 = vpop.f32.mrb[0].mxu0
        %v381 = vadd.f32 0.0, %v380
        %v382 = vpop.f32.mrb[0].mxu0
        %383 = vmatprep.mubr.f32.mxu0 0.0
        %384 = vmatmul.mubr.f32.gmra.mrb[0].mxu0 %v271
        %v385 = vpop.f32.mrb[0].mxu0
        %v386 = vadd.f32 0.0, %v385
        %v387 = vpop.f32.mrb[0].mxu0
        %388 = vmatprep.mubr.f32.mxu0 0.0
        %389 = vmatmul.mubr.f32.gmra.mrb[0].mxu0 %v272
        %v390 = vpop.f32.mrb[0].mxu0
        %v391 = vadd.f32 0.0, %v390
        %v392 = vpop.f32.mrb[0].mxu0
        %393 = vdwg.mxu0
        %394 = vst [vmem:[%s254] sm:$0xff] %v356
        %395 = vst [vmem:[%s254 + $0x8] sm:$0xff] %v361
        %396 = vst [vmem:[%s254 + $0x10] sm:$0xff] %v366
        %397 = vst [vmem:[%s254 + $0x18] sm:$0xff] %v371
        %398 = vst [vmem:[%s254 + $0x20] sm:$0xff] %v376
        %399 = vst [vmem:[%s254 + $0x28] sm:$0xff] %v381
        %400 = vst [vmem:[%s254 + $0x30] sm:$0xff] %v386
        %401 = vst [vmem:[%s254 + $0x38] sm:$0xff] %v391
        %v402 = vld [vmem:[#allocation2] sm:$0x1]
        %v403 = vadd.f32 %v356, %v361
        %v404 = vadd.f32 %v403, %v366
        %v405 = vadd.f32 %v404, %v371
        %v406 = vadd.f32 %v405, %v376
        %v407 = vadd.f32 %v406, %v381
        %v408 = vadd.f32 %v407, %v386
        %v409 = vadd.f32 %v408, %v391
        %v410 = vrot.slane %v409, 4
        %v411 = vadd.f32 %v409, %v410
        %v412 = vrot.slane %v411, 2
        %v413 = vadd.f32 %v411, %v412
        %v414 = vrot.slane %v413, 1
        %v415 = vadd.f32 %v413, %v414
        %v416 = vadd.f32 %v402, %v415
        %417 = vst [vmem:[#allocation2] sm:$0x1] %v416
        %v418 = vld [vmem:[#allocation3] sm:$0x1]
        %v419 = vmul.f32 %v356, %v356
        %v420 = vmul.f32 %v361, %v361
        %v421 = vmul.f32 %v366, %v366
        %v422 = vmul.f32 %v371, %v371
        %v423 = vmul.f32 %v376, %v376
        %v424 = vmul.f32 %v381, %v381
        %v425 = vmul.f32 %v386, %v386
        %v426 = vmul.f32 %v391, %v391
        %v427 = vadd.f32 %v419, %v420
        %v428 = vadd.f32 %v427, %v421
        %v429 = vadd.f32 %v428, %v422
        %v430 = vadd.f32 %v429, %v423
        %v431 = vadd.f32 %v430, %v424
        %v432 = vadd.f32 %v431, %v425
        %v433 = vadd.f32 %v432, %v426
        %v434 = vrot.slane %v433, 4
        %v435 = vadd.f32 %v433, %v434
        %v436 = vrot.slane %v435, 2
        %v437 = vadd.f32 %v435, %v436
        %v438 = vrot.slane %v437, 1
        %v439 = vadd.f32 %v437, %v438
        %v440 = vadd.f32 %v418, %v439
        %441 = vst [vmem:[#allocation3] sm:$0x1] %v440
        %p442 = scmp.eq.s32.totalorder %s25, 1
        // Predicated region
        $region49: #{tpu_custom_call.1} parent=35 // pred_check
          %p443 = pneg %p442
        $region50: #{tpu_custom_call.1} parent=35 // pred_check_branch
          %445 = sbr.rel (%p443) target = $region52
        $region51: #{tpu_custom_call.1} parent=35 // pred_region
          %v446 = vld [vmem:[#allocation2] sm:$0x1]
          %v447 = vmul.f32 %v446, 0.0078125
          %v448 = vld [vmem:[#allocation3] sm:$0x1]
          %v449 = vmul.f32 %v448, 0.0078125
          %v450 = vmul.f32 %v447, %v447
          %v451 = vsub.f32 %v449, %v450
          %v452 = vld [vmem:[%s2] sm:$0x1]
          %v453 = vadd.f32 %v451, 1e-05
          %v454 = vrsqrt.pop %v453
          %v455 = vmul.f32 %v452, %v454
          %v456 = vld [vmem:[%s3] sm:$0x1]
          %v457 = vmul.f32 %v447, %v455
          %v458 = vsub.f32 %v456, %v457
          %v460 = vlaneseq
          %v461 = vshrl.u32 %v460, 7
          %v462 = vsub.s32 0, %v461
          %v463 = vrot.slane %v458, %v462
          %vm465 = vcmask 1040384
          %v466 = vsel %vm465, %v455, %v463
          %467 = vst [vmem:[#allocation10] sm:$0x3] %v466
        $region52: #{tpu_custom_call.1} parent=35 // pred_fallthru
          _
        %s468 = sand.u32 %s122, 1
        %s469 = scalar_lea.sflag [#allocation6], %s468
        %s470 = sand.u32 %s122, 1
        %s471 = smul.addr %s470, 64
        %s472 = scalar_lea.vmem [#allocation9], %s471
        // Predicated region
        $region53: #{tpu_custom_call.1} parent=35 // pred_check
          %p473 = pneg %p132
        $region54: #{tpu_custom_call.1} parent=35 // pred_check_branch
          %475 = sbr.rel (%p473) target = $region56
        $region55: #{tpu_custom_call.1} parent=35 // pred_region
          %s476 = smul.u32 8, %s25
          %s478 = ssub.s32 1024, 1024
          %479 = vsyncadd %s469, %s478
          %s480 = smul.addr %s476, 128
          %s481 = scalar_lea.hbm %s4, %s480
          %s482 = sshll.u32 %s472, 4
          %s483 = int_to_ptr.vmem [resolvable:$true] %s482
          %488 = dma.vmem_to_hbm [thread:$0]  %s483, 1024, %s481, %s469, 128, 128, 8
        $region56: #{tpu_custom_call.1} parent=35 // pred_fallthru
          _
        // Predicated region
        $region57: #{tpu_custom_call.1} parent=35 // pred_check
          %p489 = pneg %p153
        $region58: #{tpu_custom_call.1} parent=35 // pred_check_branch
          %491 = sbr.rel (%p489) target = $region60
        $region59: #{tpu_custom_call.1} parent=35 // pred_region
          %s493 = ssub.s32 32, 32
          %494 = vsyncadd [#allocation11], %s493
          %s496 = sshll.u32 [#allocation10], 4
          %s497 = int_to_ptr.vmem [resolvable:$true] %s496
          %499 = dma.vmem_to_hbm [thread:$0]  %s497, 32, %s5, [#allocation11]
        $region60: #{tpu_custom_call.1} parent=35 // pred_fallthru
          _
        // Predicated region
        $region61: #{tpu_custom_call.1} parent=35 // pred_check
          %p500 = pneg %p153
        $region62: #{tpu_custom_call.1} parent=35 // pred_check_branch
          %502 = sbr.rel (%p500) target = $region64
        $region63: #{tpu_custom_call.1} parent=35 // pred_region
          %503 = dma.done [#allocation11], 32
        $region64: #{tpu_custom_call.1} parent=35 // pred_fallthru
          _
      $region36: #{tpu_custom_call.1} parent=5 // pred_fallthru
        _
      %p504 = scmp.le.s32.totalorder 2, %s20
      // Predicated region
      $region65: #{tpu_custom_call.1} parent=5 // pred_check
        %p505 = pneg %p504
      $region66: #{tpu_custom_call.1} parent=5 // pred_check_branch
        %507 = sbr.rel (%p505) target = $region68
      $region67: #{tpu_custom_call.1} parent=5 // pred_region
        %s508 = ssub.s32 %s20, 2
        // Predicated region
        $region69: #{tpu_custom_call.1} parent=67 // pred_check
          %p509 = pneg %p138
        $region70: #{tpu_custom_call.1} parent=67 // pred_check_branch
          %511 = sbr.rel (%p509) target = $region72
        $region71: #{tpu_custom_call.1} parent=67 // pred_region
          %s512 = sand.u32 %s123, 1
          %s513 = scalar_lea.sflag [#allocation6], %s512
          %s514 = sand.u32 %s123, 1
          %s515 = smul.addr %s514, 64
          %s516 = scalar_lea.vmem [#allocation9], %s515
          %517 = dma.done %s513, 1024
        $region72: #{tpu_custom_call.1} parent=67 // pred_fallthru
          _
      $region68: #{tpu_custom_call.1} parent=5 // pred_fallthru
        _
    $region6: #{tpu_custom_call.1} parent=1 // loop_footer
      %s24 = sadd.s32 1, %s20
    $region7: #{tpu_custom_call.1} parent=1 // loop_footer_branch
      %19 = sbr.rel target = $region3
    $region8: #{tpu_custom_call.1} parent=1 // loop_exit
      _
    %518 = vsyncpa [#allocation5], 1
    %s519 = scalar_lea.sflag [#allocation5], 1
    %520 = vsyncpa %s519, 1
    %521 = vsyncpa [#allocation8], 1
    %522 = vsyncpa [#allocation6], 1
    %s523 = scalar_lea.sflag [#allocation6], 1
    %524 = vsyncpa %s523, 1
    %525 = vsyncpa [#allocation11], 1

</llo_original>
